<compile_context>
chip_gen: v5e
topology: v5e:2x2
jax: 0.10.0
libtpu: 0.0.40
codegen_flags: <defaults>
</compile_context>

<pallas_src>
import jax
import jax.numpy as jnp
from jax.experimental import pallas as pl
from jax.experimental.pallas import tpu as pltpu

_HEADROOM_BYTES = 2 * 1024 * 1024       # slack for compiler-internal scratch
_MIN_T_HW = 2048                        # lane floor: keep DMA rows long for HBM bursts
_LANES = 128


def _vmem_budget():
    """(budget, physical) — budget is ~55% of this generation's VMEM."""
    cap = 64 * 1024 * 1024              # conservative fallback (v7x per-core physical)
    try:
        cap = int(getattr(pltpu.get_tpu_info(), "vmem_capacity_bytes", cap))
    except Exception:
        pass
    budget = max(16 * 1024 * 1024, int(cap * 0.55))
    return budget, cap


def _working_set_bytes(t_nc, t_hw, C, itemsize, n_xbuf):
    w_bufs = 2 * t_nc * C * itemsize          # weight tile, double-buffered
    x_bufs = n_xbuf * C * t_hw * itemsize     # x tile, n_xbuf-deep pipeline
    o_bufs = 2 * t_nc * 4                     # output tile, double-buffered
    accs = 2 * t_nc * _LANES * 4              # running sum/max scratch
    s_tmp = 2 * t_nc * t_hw * 4               # f32 matmul result + branch temporaries
    return w_bufs + x_bufs + o_bufs + accs + s_tmp


def _select_tiles(HW, C, num_class, B, itemsize, budget, t_hw_req, t_nc_req, n_xbuf):
    # --- class tile: sublane axis of the weight / lane axis of the output -----
    if t_nc_req is not None:
        t = int(t_nc_req)
        t_nc = num_class if t >= num_class else max(_LANES, (t // _LANES) * _LANES)
    else:
        t_nc = num_class if num_class <= 256 else 256
        # v7x has 2 TensorCores: when B == 1 keep >= 2 units of parallel grid
        # work on the class axis so one core does not idle.
        if B == 1 and t_nc >= num_class and num_class > _LANES:
            t_nc = _LANES

    # --- spatial tile: budget x buffers AND the (t_nc, t_hw) f32 matmul result
    def cap_t_hw(tnc):
        fixed = (_HEADROOM_BYTES + 2 * tnc * C * itemsize + 2 * tnc * 4
                 + 2 * tnc * _LANES * 4)
        per_lane = n_xbuf * C * itemsize + 2 * tnc * 4
        return max(0, (budget - fixed) // per_lane)

    if t_hw_req is not None:
        t = int(t_hw_req)
        t_hw = HW if t >= HW else max(_LANES, (t // _LANES) * _LANES)
    else:
        cap = cap_t_hw(t_nc)
        if cap < min(_MIN_T_HW, HW) and t_nc > _LANES:
            t_nc = _LANES                 # shrink the class tile before the burst length
            cap = cap_t_hw(t_nc)
        t_hw = HW if cap >= HW else max(_LANES, (cap // _LANES) * _LANES)

    return int(t_hw), int(t_nc)


def _make_kernel(la, inv_hw, hw, t_hw, needs_mask, lane_acc, row_out):
    la = float(la)
    inv_hw = float(inv_hw)
    rem = hw % t_hw if needs_mask else t_hw   # Python constant

    def kernel(w_ref, x_ref, o_ref, sum_ref, max_ref):
        # w_ref:   (t_nc, C)       weight tile (reused over b and k)
        # x_ref:   (1, C, t_hw)    spatial tile of the current batch element
        # o_ref:   (1, 1, t_nc) if row_out else (1, t_nc, 1)
        # sum/max: (t_nc, 128) if lane_acc else (t_nc, 1), f32 scratch
        k = pl.program_id(2)
        last = pl.num_programs(2) - 1

        @pl.when(k == 0)
        def _init():
            sum_ref[...] = jnp.zeros_like(sum_ref)
            max_ref[...] = jnp.full_like(max_ref, -jnp.inf)

        # 1x1 conv (no bias) == per-pixel matmul: (t_nc, C) @ (C, t_hw), f32 accum.
        s = jnp.dot(w_ref[...], x_ref[0], preferred_element_type=jnp.float32)

        def fold(limit):
            """Fold columns [0, limit) of `s` into the running accumulators."""
            if lane_acc:
                # Lane-dense partials: VPU add/max per aligned 128-lane group;
                # the single cross-lane (XLU) reduce is deferred to finalize.
                n_full, part = limit // _LANES, limit % _LANES
                acc_s = acc_m = None
                for i in range(n_full):
                    blk = s[:, i * _LANES:(i + 1) * _LANES]
                    acc_s = blk if acc_s is None else acc_s + blk
                    acc_m = blk if acc_m is None else jnp.maximum(acc_m, blk)
                if part:
                    blk = s[:, n_full * _LANES:(n_full + 1) * _LANES]
                    lane = jax.lax.broadcasted_iota(jnp.int32, blk.shape, 1)
                    ok = lane < part
                    bs = jnp.where(ok, blk, 0.0)
                    bm = jnp.where(ok, blk, -jnp.inf)
                    acc_s = bs if acc_s is None else acc_s + bs
                    acc_m = bm if acc_m is None else jnp.maximum(acc_m, bm)
                sum_ref[...] = sum_ref[...] + acc_s
                max_ref[...] = jnp.maximum(max_ref[...], acc_m)
            else:
                # t_hw == HW and HW % 128 != 0: single spatial step, direct reduce.
                sum_ref[...] = sum_ref[...] + jnp.sum(s, axis=1, keepdims=True)
                max_ref[...] = jnp.maximum(max_ref[...],
                                           jnp.max(s, axis=1, keepdims=True))

        if needs_mask:
            # HW % t_hw is a Python constant: only the final spatial tile pays
            # any masking cost; every other step reduces `s` unmasked.
            @pl.when(k < last)
            def _full_tiles():
                fold(t_hw)

            @pl.when(k == last)
            def _tail_tile():
                fold(rem)
        else:
            fold(t_hw)

        @pl.when(k == last)
        def _finalize():
            if lane_acc:
                if row_out:
                    tot = jnp.sum(sum_ref[...].T, axis=0, keepdims=True)  # (1, t_nc)
                    mx = jnp.max(max_ref[...].T, axis=0, keepdims=True)   # (1, t_nc)
                else:
                    tot = jnp.sum(sum_ref[...], axis=1, keepdims=True)    # (t_nc, 1)
                    mx = jnp.max(max_ref[...], axis=1, keepdims=True)
            else:
                tot, mx = sum_ref[...], max_ref[...]                      # (t_nc, 1)
            o_ref[0] = (tot * inv_hw + la * mx).astype(o_ref.dtype)

    return kernel


def residual_attention(x_nchw, weight_oc, la=0.2, *,
                       t_hw=None, t_nc=None, x_buffers=2, compute_dtype=None):
    """ResidualAttention forward.

    x_nchw:    (B, C, H, W) feature map (PyTorch NCHW layout).
    weight_oc: (num_class, C) -- the 1x1 Conv2d weight with its 1x1 tail squeezed.
    Returns (B, num_class) f32 scores = mean_hw(conv(x)) + la * max_hw(conv(x)).

    compute_dtype: optionally cast x/w (e.g. jnp.bfloat16) before the kernel —
      recommended on v5e / memory-bound configs (halves the HBM read of x, MXU's
      native bf16 path); f32 accumulation is kept either way.  Note: the weight
      is always cast to the compute dtype (documented precision trade-off).
    """
    B, C, H, W = x_nchw.shape
    num_class = weight_oc.shape[0]
    HW = H * W

    # NCHW -> (B, C, HW) is a contiguous reshape: no wrapper transpose pass.
    x = x_nchw.reshape(B, C, HW)
    if compute_dtype is not None:
        x = x.astype(compute_dtype)
    w = weight_oc.astype(x.dtype)

    itemsize = jnp.dtype(x.dtype).itemsize
    n_xbuf = max(2, int(x_buffers))
    budget, cap = _vmem_budget()
    t_hw_, t_nc_ = _select_tiles(HW, C, num_class, B, itemsize, budget,
                                 t_hw, t_nc, n_xbuf)

    n_hw = pl.cdiv(HW, t_hw_)
    n_nc = pl.cdiv(num_class, t_nc_)
    needs_mask = (HW % t_hw_) != 0
    lane_acc = (t_hw_ % _LANES) == 0
    row_out = lane_acc and (t_nc_ % 8) == 0   # lane-dense (1, t_nc) output blocks

    kernel = _make_kernel(la=la, inv_hw=1.0 / HW, hw=HW, t_hw=t_hw_,
                          needs_mask=needs_mask, lane_acc=lane_acc, row_out=row_out)

    if row_out:
        out_shape = jax.ShapeDtypeStruct((B, 1, num_class), jnp.float32)
        out_spec = pl.BlockSpec((1, 1, t_nc_), lambda b, j, k: (b, 0, j))
    else:
        out_shape = jax.ShapeDtypeStruct((B, num_class, 1), jnp.float32)
        out_spec = pl.BlockSpec((1, t_nc_, 1), lambda b, j, k: (b, j, 0))

    x_spec_kwargs = {}
    if n_xbuf > 2:
        # Optional deeper pipeline on the dominant (x) stream; counted in budget.
        x_spec_kwargs["pipeline_mode"] = pl.Buffered(n_xbuf)

    acc_lanes = _LANES if lane_acc else 1
    grid_spec = pltpu.PrefetchScalarGridSpec(
        num_scalar_prefetch=0,
        grid=(B, n_nc, n_hw),                       # spatial reduction axis innermost
        in_specs=[
            pl.BlockSpec((t_nc_, C), lambda b, j, k: (j, 0)),        # weight (reused)
            pl.BlockSpec((1, C, t_hw_), lambda b, j, k: (b, 0, k),   # x (streamed)
                         **x_spec_kwargs),
        ],
        out_specs=out_spec,
        scratch_shapes=[
            pltpu.VMEM((t_nc_, acc_lanes), jnp.float32),   # running sum
            pltpu.VMEM((t_nc_, acc_lanes), jnp.float32),   # running max
        ],
    )

    # VMEM limit: selected working set (incl. the f32 matmul intermediate),
    # clamped to ~55% (and never above 90%) of this generation's physical VMEM.
    est = _working_set_bytes(t_nc_, t_hw_, C, itemsize, n_xbuf)
    vmem_limit = int(min(max(budget, est + _HEADROOM_BYTES), int(cap * 0.9)))

    cost = pl.CostEstimate(
        flops=2 * B * num_class * C * HW,
        transcendentals=0,
        bytes_accessed=(x.size * itemsize + w.size * itemsize + B * num_class * 4),
    )

    out = pl.pallas_call(
        kernel,
        out_shape=out_shape,
        grid_spec=grid_spec,
        compiler_params=pltpu.CompilerParams(
            dimension_semantics=("parallel", "parallel", "arbitrary"),
            vmem_limit_bytes=vmem_limit,
        ),
        cost_estimate=cost,
    )(w, x)

    return out.reshape(B, num_class)


def residual_attention_ref(x_nchw, weight_oc, la=0.2):
    """Pure-JAX reference matching the PyTorch forward (true f32 math)."""
    B, C, H, W = x_nchw.shape
    xf = x_nchw.astype(jnp.float32)
    wf = weight_oc.astype(jnp.float32)
    y = jnp.einsum("bchw,oc->bohw", xf, wf,
                   precision=jax.lax.Precision.HIGHEST).reshape(
        B, weight_oc.shape[0], H * W)
    return jnp.mean(y, axis=2) + la * jnp.max(y, axis=2)


if __name__ == "__main__":
    key = jax.random.PRNGKey(0)
    k1, k2, k3, k4 = jax.random.split(key, 4)
    LA = 0.2

    # --- Case A: production path (auto tile selection), bf16 inputs ----------
    B, C, H, W, NC = 2, 32, 16, 16, 256
    x_a = jax.random.normal(k1, (B, C, H, W), jnp.float32).astype(jnp.bfloat16)
    w_a = (jax.random.normal(k2, (NC, C), jnp.float32) * 0.05).astype(jnp.bfloat16)
    out_a = jax.block_until_ready(residual_attention(x_a, w_a, la=LA))
    ref_a = residual_attention_ref(x_a, w_a, la=LA)
    assert out_a.shape == (B, NC)
    err_a = float(jnp.max(jnp.abs(out_a - ref_a)))
    assert jnp.allclose(out_a, ref_a, atol=2e-3, rtol=2e-3), f"case A max err {err_a}"

    # --- Case B: tiled path — multi-step spatial reduction, masked tail
    #     (HW % t_hw != 0) and a partial class tile (num_class % t_nc != 0) ----
    B2, C2, H2, W2, NC2 = 1, 48, 16, 20, 300      # HW = 320 -> 3 spatial tiles of 128
    x_b = jax.random.normal(k3, (B2, C2, H2, W2), jnp.float32)
    w_b = jax.random.normal(k4, (NC2, C2), jnp.float32) * 0.05
    out_b = jax.block_until_ready(
        residual_attention(x_b, w_b, la=LA, t_hw=128, t_nc=128))
    ref_b = residual_attention_ref(x_b, w_b, la=LA)
    assert out_b.shape == (B2, NC2)
    err_b = float(jnp.max(jnp.abs(out_b - ref_b)))
    assert jnp.allclose(out_b, ref_b, atol=5e-3, rtol=5e-3), f"case B max err {err_b}"

    print("KERNEL_OK")
</pallas_src>

<mosaic_0001>
module attributes {stable_mosaic.version = 11 : i64} {
  func.func @kernel(%arg0: i32, %arg1: i32, %arg2: i32, %arg3: memref<256x32xbf16, #tpu.memory_space<vmem>>, %arg4: memref<1x32x256xbf16, #tpu.memory_space<vmem>>, %arg5: memref<1x1x256xf32, #tpu.memory_space<vmem>>, %arg6: memref<256x128xf32, #tpu.memory_space<vmem>>, %arg7: memref<256x128xf32, #tpu.memory_space<vmem>>) attributes {dimension_semantics = [#tpu.dimension_semantics<parallel>, #tpu.dimension_semantics<parallel>, #tpu.dimension_semantics<arbitrary>], iteration_bounds = array<i64: 2, 1, 1>, scalar_prefetch = 0 : i64, scratch_operands = 2 : i64, tpu.core_type = #tpu.core_type<tc>, window_params = [{transform_indices = @transform_0, window_bounds = array<i64: 256, 32>}, {transform_indices = @transform_1, window_bounds = array<i64: 1, 32, 256>}, {transform_indices = @transform_2, window_bounds = array<i64: 1, 1, 256>}]} {
    %c0_i32 = arith.constant 0 : i32
    %0 = arith.cmpi eq, %arg2, %c0_i32 : i32
    %1 = arith.extui %0 : i1 to i32
    %c0_i32_0 = arith.constant 0 : i32
    %2 = arith.cmpi ne, %1, %c0_i32_0 : i32
    scf.if %2 {
      %cst_15 = arith.constant 0.000000e+00 : f32
      %20 = vector.broadcast %cst_15 : f32 to vector<256x128xf32>
      %c0_16 = arith.constant 0 : index
      %c0_17 = arith.constant 0 : index
      %21 = vector.load %arg6[%c0_16, %c0_17] : memref<256x128xf32, #tpu.memory_space<vmem>>, vector<256x128xf32>
      tpu.vector_store %arg6[%c0_16, %c0_17], %20 {strides = array<i32>} : memref<256x128xf32, #tpu.memory_space<vmem>>, vector<256x128xf32>,
      %cst_18 = arith.constant 0xFF800000 : f32
      %22 = vector.broadcast %cst_18 : f32 to vector<256x128xf32>
      %c0_19 = arith.constant 0 : index
      %c0_20 = arith.constant 0 : index
      %23 = vector.load %arg7[%c0_19, %c0_20] : memref<256x128xf32, #tpu.memory_space<vmem>>, vector<256x128xf32>
      tpu.vector_store %arg7[%c0_19, %c0_20], %22 {strides = array<i32>} : memref<256x128xf32, #tpu.memory_space<vmem>>, vector<256x128xf32>,
    } else {
    }
    %c0 = arith.constant 0 : index
    %c0_1 = arith.constant 0 : index
    %3 = vector.load %arg3[%c0, %c0_1] : memref<256x32xbf16, #tpu.memory_space<vmem>>, vector<256x32xbf16>
    %c0_2 = arith.constant 0 : index
    %c0_3 = arith.constant 0 : index
    %c0_4 = arith.constant 0 : index
    %4 = vector.load %arg4[%c0_2, %c0_3, %c0_4] : memref<1x32x256xbf16, #tpu.memory_space<vmem>>, vector<1x32x256xbf16>
    %5 = vector.shape_cast %4 : vector<1x32x256xbf16> to vector<32x256xbf16>
    %cst = arith.constant dense<0.000000e+00> : vector<256x256xf32>
    %6 = tpu.matmul %3, %5, %cst {dimension_numbers = #tpu.dot_dimension_numbers<[1], [0], [0], [1], [0, 0, 1, 1], [], []>} : vector<256x32xbf16>, vector<32x256xbf16>, vector<256x256xf32> -> vector<256x256xf32>
    %7 = vector.extract_strided_slice %6 {offsets = [0, 0], sizes = [256, 128], strides = [1, 1]} : vector<256x256xf32> to vector<256x128xf32>
    %8 = vector.extract_strided_slice %6 {offsets = [0, 128], sizes = [256, 128], strides = [1, 1]} : vector<256x256xf32> to vector<256x128xf32>
    %9 = arith.addf %7, %8 : vector<256x128xf32>
    %10 = arith.maximumf %7, %8 : vector<256x128xf32>
    %c0_5 = arith.constant 0 : index
    %c0_6 = arith.constant 0 : index
    %11 = vector.load %arg6[%c0_5, %c0_6] : memref<256x128xf32, #tpu.memory_space<vmem>>, vector<256x128xf32>
    %12 = arith.addf %11, %9 : vector<256x128xf32>
    %c0_7 = arith.constant 0 : index
    %c0_8 = arith.constant 0 : index
    %13 = vector.load %arg6[%c0_7, %c0_8] : memref<256x128xf32, #tpu.memory_space<vmem>>, vector<256x128xf32>
    tpu.vector_store %arg6[%c0_7, %c0_8], %12 {strides = array<i32>} : memref<256x128xf32, #tpu.memory_space<vmem>>, vector<256x128xf32>,
    %c0_9 = arith.constant 0 : index
    %c0_10 = arith.constant 0 : index
    %14 = vector.load %arg7[%c0_9, %c0_10] : memref<256x128xf32, #tpu.memory_space<vmem>>, vector<256x128xf32>
    %15 = arith.maximumf %14, %10 : vector<256x128xf32>
    %c0_11 = arith.constant 0 : index
    %c0_12 = arith.constant 0 : index
    %16 = vector.load %arg7[%c0_11, %c0_12] : memref<256x128xf32, #tpu.memory_space<vmem>>, vector<256x128xf32>
    tpu.vector_store %arg7[%c0_11, %c0_12], %15 {strides = array<i32>} : memref<256x128xf32, #tpu.memory_space<vmem>>, vector<256x128xf32>,
    %c0_i32_13 = arith.constant 0 : i32
    %17 = arith.cmpi eq, %arg2, %c0_i32_13 : i32
    %18 = arith.extui %17 : i1 to i32
    %c0_i32_14 = arith.constant 0 : i32
    %19 = arith.cmpi ne, %18, %c0_i32_14 : i32
    scf.if %19 {
      %c0_15 = arith.constant 0 : index
      %c0_16 = arith.constant 0 : index
      %20 = vector.load %arg6[%c0_15, %c0_16] : memref<256x128xf32, #tpu.memory_space<vmem>>, vector<256x128xf32>
      %21 = tpu.transpose %20, [1, 0] : vector<256x128xf32> -> vector<128x256xf32>
      %cst_17 = arith.constant dense<0.000000e+00> : vector<256xf32>
      %22 = vector.multi_reduction <add>, %21, %cst_17 [0] : vector<128x256xf32> to vector<256xf32>
      %23 = vector.shape_cast %22 : vector<256xf32> to vector<1x256xf32>
      %c0_18 = arith.constant 0 : index
      %c0_19 = arith.constant 0 : index
      %24 = vector.load %arg7[%c0_18, %c0_19] : memref<256x128xf32, #tpu.memory_space<vmem>>, vector<256x128xf32>
      %25 = tpu.transpose %24, [1, 0] : vector<256x128xf32> -> vector<128x256xf32>
      %cst_20 = arith.constant dense<0xFF800000> : vector<256xf32>
      %26 = vector.multi_reduction <maximumf>, %25, %cst_20 [0] : vector<128x256xf32> to vector<256xf32>
      %27 = vector.shape_cast %26 : vector<256xf32> to vector<1x256xf32>
      %cst_21 = arith.constant 3.906250e-03 : f32
      %28 = vector.broadcast %cst_21 : f32 to vector<1x256xf32>
      %29 = arith.mulf %23, %28 : vector<1x256xf32>
      %cst_22 = arith.constant 2.000000e-01 : f32
      %30 = vector.broadcast %cst_22 : f32 to vector<1x256xf32>
      %31 = arith.mulf %30, %27 : vector<1x256xf32>
      %32 = arith.addf %29, %31 : vector<1x256xf32>
      %c0_23 = arith.constant 0 : index
      %c0_24 = arith.constant 0 : index
      %c0_25 = arith.constant 0 : index
      %33 = vector.load %arg5[%c0_23, %c0_24, %c0_25] : memref<1x1x256xf32, #tpu.memory_space<vmem>>, vector<1x1x256xf32>
      %34 = vector.shape_cast %33 : vector<1x1x256xf32> to vector<1x256xf32>
      %35 = vector.shape_cast %32 : vector<1x256xf32> to vector<1x1x256xf32>
      tpu.vector_store %arg5[%c0_23, %c0_24, %c0_25], %35 {strides = array<i32>} : memref<1x1x256xf32, #tpu.memory_space<vmem>>, vector<1x1x256xf32>,
    } else {
    }
    return
  }
  func.func @transform_0(%arg0: i32, %arg1: i32, %arg2: i32) -> (i32, i32) {
    %c0_i32 = arith.constant 0 : i32
    %c0_i32_0 = arith.constant 0 : i32
    return %arg1, %c0_i32 : i32, i32
  }
  func.func @transform_1(%arg0: i32, %arg1: i32, %arg2: i32) -> (i32, i32, i32) {
    %c0_i32 = arith.constant 0 : i32
    %c0_i32_0 = arith.constant 0 : i32
    return %arg0, %c0_i32, %arg2 : i32, i32, i32
  }
  func.func @transform_2(%arg0: i32, %arg1: i32, %arg2: i32) -> (i32, i32, i32) {
    %c0_i32 = arith.constant 0 : i32
    %c0_i32_0 = arith.constant 0 : i32
    return %arg0, %c0_i32, %arg1 : i32, i32, i32
  }
}

</mosaic_0001>

<llo_original>
// kernel: tpu_custom_call.1
$region0: #{tpu_custom_call.1}
  #allocation0 [shape = 'u32[]', space=smem, size = 0x4, offset = 0x4, fixed_abs, tag = 'smem constant byte address 0x4 - core index']
  #allocation1 [shape = 'u32[72,128]{1,0:T(1,128)}', space=vmem, size = 0x9000, scoped, tag = 'internal scratch']
  #allocation2 [shape = 'f32[256,128]{1,0:T(8,128)}', space=vmem, size = 0x20000, scoped, tag = 'scratch operand']
  #allocation3 [shape = 'f32[256,128]{1,0:T(8,128)}', space=vmem, size = 0x20000, scoped, tag = 'scratch operand']
  %s0 = inlined_call_operand.vmem [shape: bf16[256,32], index: 0, kind: input, shape index: {}]
  %s1 = inlined_call_operand.vmem [shape: bf16[2,32,256], index: 1, kind: input, shape index: {}]
  %s2 = inlined_call_operand.hbm [shape: f32[2,1,256], index: 2, kind: output, shape index: {}]
  %s3 = sld [smem:[#allocation0]]
  $region49: #{tpu_custom_call.1} parent=0
    _
  %s5 = ssub.s32 1, %s3
  %s6 = scalar_select 0, %s5, %s3
  $region1: #{tpu_custom_call.1} parent=0
    #allocation4 [shape = 'u8[2048]{0}', space=vmem, size = 0x800, scoped, tag = 'output window, operand 0']
    #allocation5 [shape = 's32[2]{0}', space=sflag, size = 0x8, scoped, tag = 'scoped memory for tpu_custom_call.1']
    %7 = vsyncpa [#allocation5], 0
    %s8 = scalar_lea.sflag [#allocation5], 1
    %9 = vsyncpa %s8, 0
    loop: start=0, step=1, limit=4
    $region2: #{tpu_custom_call.1} parent=1 // loop_pre_header
      _
    $region3: #{tpu_custom_call.1} parent=1 // loop_header
      %s11 = sphi 0, %s15
      %p12 = scmp.ge.s32.totalorder %s11, 4
      %s18 = sphi 0, %s37
      %s19 = sphi 0, %s33
      %s20 = sphi 0, %s29
      %s21 = sphi 0, %s18
      %s22 = sphi 0, %s19
      %s23 = sphi 0, %s20
      %s24 = sphi 0, %s21
      %s25 = sphi 0, %s22
      %s26 = sphi 0, %s23
      %s40 = sphi 0, %s42
      %s43 = sphi 0, %s40
      %s44 = sphi 0, %s43
      %s60 = sphi 0, %s44
      %s68 = sphi 0, %s70
      %s71 = sphi 0, %s68
      %s72 = sphi 0, %s71
      %s88 = sphi 0, %s72
      %s96 = sphi 0, %s98
      %s99 = sphi 0, %s96
      %s100 = sphi 0, %s99
      %s116 = sphi 0, %s100
    $region4: #{tpu_custom_call.1} parent=1 // loop_header_branch
      %14 = sbr.rel (%p12) target = $region8
    $region5: #{tpu_custom_call.1} parent=1 // loop_body
      %s16 = ssub.s32 %s11, 1
      %s17 = ssub.s32 %s11, 2
      %s27 = sadd.s32 1, %s20
      %p28 = scmp.ge.s32.totalorder %s27, 1
      %s29 = scalar_select %p28, 0, %s27
      %s30 = sadd.s32 1, %s19
      %s31 = scalar_select %p28, %s30, %s19
      %p32 = scmp.ge.s32.totalorder %s31, 1
      %s33 = scalar_select %p32, 0, %s31
      %s34 = sadd.s32 1, %s18
      %s35 = scalar_select %p32, %s34, %s18
      %p36 = scmp.ge.s32.totalorder %s35, 2
      %s37 = scalar_select %p36, 0, %s35
      %s38 = ssub.s32 %s19, %s33
      %p39 = scmp.eq.s32.totalorder %s38, 0
      %s41 = sadd.s32 %s40, 1
      %s42 = scalar_select %p39, %s40, %s41
      %p45 = pneg %p39
      %p46 = scmp.eq.s32.totalorder %s11, 1
      %p47 = por %p45, %p46
      %p48 = scmp.ne.s32.totalorder %s40, %s43
      %p49 = scmp.eq.s32.totalorder %s11, 0
      %p50 = por %p48, %p49
      %p51 = scmp.ne.s32.totalorder %s40, %s43
      %p52 = scmp.eq.s32.totalorder %s16, 1
      %p53 = por %p51, %p52
      %p54 = scmp.ne.s32.totalorder %s43, %s44
      %p55 = scmp.eq.s32.totalorder %s16, 0
      %p56 = por %p54, %p55
      %p57 = scmp.ne.s32.totalorder %s43, %s44
      %p58 = scmp.eq.s32.totalorder %s17, 1
      %p59 = por %p57, %p58
      %p61 = scmp.ne.s32.totalorder %s44, %s60
      %p62 = scmp.eq.s32.totalorder %s17, 0
      %p63 = por %p61, %p62
      %s64 = ssub.s32 %s18, %s37
      %s65 = ssub.s32 %s20, %s29
      %s66 = sor.u32 %s64, %s65
      %p67 = scmp.eq.s32.totalorder %s66, 0
      %s69 = sadd.s32 %s68, 1
      %s70 = scalar_select %p67, %s68, %s69
      %p73 = pneg %p67
      %p74 = scmp.eq.s32.totalorder %s11, 1
      %p75 = por %p73, %p74
      %p76 = scmp.ne.s32.totalorder %s68, %s71
      %p77 = scmp.eq.s32.totalorder %s11, 0
      %p78 = por %p76, %p77
      %p79 = scmp.ne.s32.totalorder %s68, %s71
      %p80 = scmp.eq.s32.totalorder %s16, 1
      %p81 = por %p79, %p80
      %p82 = scmp.ne.s32.totalorder %s71, %s72
      %p83 = scmp.eq.s32.totalorder %s16, 0
      %p84 = por %p82, %p83
      %p85 = scmp.ne.s32.totalorder %s71, %s72
      %p86 = scmp.eq.s32.totalorder %s17, 1
      %p87 = por %p85, %p86
      %p89 = scmp.ne.s32.totalorder %s72, %s88
      %p90 = scmp.eq.s32.totalorder %s17, 0
      %p91 = por %p89, %p90
      %s92 = ssub.s32 %s18, %s37
      %s93 = ssub.s32 %s19, %s33
      %s94 = sor.u32 %s92, %s93
      %p95 = scmp.eq.s32.totalorder %s94, 0
      %s97 = sadd.s32 %s96, 1
      %s98 = scalar_select %p95, %s96, %s97
      %p101 = pneg %p95
      %p102 = scmp.eq.s32.totalorder %s11, 1
      %p103 = por %p101, %p102
      %p104 = scmp.ne.s32.totalorder %s96, %s99
      %p105 = scmp.eq.s32.totalorder %s11, 0
      %p106 = por %p104, %p105
      %p107 = scmp.ne.s32.totalorder %s96, %s99
      %p108 = scmp.eq.s32.totalorder %s16, 1
      %p109 = por %p107, %p108
      %p110 = scmp.ne.s32.totalorder %s99, %s100
      %p111 = scmp.eq.s32.totalorder %s16, 0
      %p112 = por %p110, %p111
      %p113 = scmp.ne.s32.totalorder %s99, %s100
      %p114 = scmp.eq.s32.totalorder %s17, 1
      %p115 = por %p113, %p114
      %p117 = scmp.ne.s32.totalorder %s100, %s116
      %p118 = scmp.eq.s32.totalorder %s17, 0
      %p119 = por %p117, %p118
      %p120 = scmp.le.s32.totalorder 1, %s11
      %p121 = scmp.lt.s32.totalorder %s11, 3
      %p122 = pnand %p120, %p121
      %p123 = pneg %p122
      // Predicated region
      $region9: #{tpu_custom_call.1} parent=5 // pred_check
        _
      $region10: #{tpu_custom_call.1} parent=5 // pred_check_branch
        %125 = sbr.rel (%p122) target = $region12
      $region11: #{tpu_custom_call.1} parent=5 // pred_region
        %s126 = ssub.s32 %s11, 1
        // Predicated region
        $region13: #{tpu_custom_call.1} parent=11 // pred_check
          %p127 = pneg %p56
        $region14: #{tpu_custom_call.1} parent=11 // pred_check_branch
          %129 = sbr.rel (%p127) target = $region16
        $region15: #{tpu_custom_call.1} parent=11 // pred_region
          %s130 = smul.u32 32, %s22
          %p131 = scmp.lt.s32.totalorder %s130, 31
          %s132 = scalar_select %p131, %s130, 31
          %s133 = smul.addr %s132, 4
          %s134 = scalar_lea.vmem %s0, %s133
          %s135 = smul.u32 32, %s22
        $region16: #{tpu_custom_call.1} parent=11 // pred_fallthru
          _
      $region12: #{tpu_custom_call.1} parent=5 // pred_fallthru
        _
      %p136 = scmp.lt.s32.totalorder %s11, 2
      // Predicated region
      $region17: #{tpu_custom_call.1} parent=5 // pred_check
        %p137 = pneg %p136
      $region18: #{tpu_custom_call.1} parent=5 // pred_check_branch
        %139 = sbr.rel (%p137) target = $region20
      $region19: #{tpu_custom_call.1} parent=5 // pred_region
        // Predicated region
        $region21: #{tpu_custom_call.1} parent=19 // pred_check
          %p140 = pneg %p78
        $region22: #{tpu_custom_call.1} parent=19 // pred_check_branch
          %142 = sbr.rel (%p140) target = $region24
        $region23: #{tpu_custom_call.1} parent=19 // pred_region
          %s143 = smul.u32 2, %s20
          %p144 = scmp.lt.s32.totalorder %s18, 1
          %s145 = scalar_select %p144, %s18, 1
          %p146 = scmp.lt.s32.totalorder %s143, 1
          %s147 = scalar_select %p146, %s143, 1
          %s148 = smul.addr %s145, 8
          %s149 = sadd.s32 %s147, %s148
          %s150 = smul.addr %s149, 4
          %s151 = scalar_lea.vmem %s1, %s150
          %s152 = smul.u32 2, %s20
        $region24: #{tpu_custom_call.1} parent=19 // pred_fallthru
          _
      $region20: #{tpu_custom_call.1} parent=5 // pred_fallthru
        _
      %p153 = scmp.le.s32.totalorder 1, %s11
      %p154 = scmp.lt.s32.totalorder %s11, 3
      %p155 = pnand %p153, %p154
      %p156 = pneg %p155
      // Predicated region
      $region25: #{tpu_custom_call.1} parent=5 // pred_check
        _
      $region26: #{tpu_custom_call.1} parent=5 // pred_check_branch
        %158 = sbr.rel (%p155) target = $region28
      $region27: #{tpu_custom_call.1} parent=5 // pred_region
        %s159 = ssub.s32 %s11, 1
        %s160 = smul.u32 32, %s22
        %p161 = scmp.lt.s32.totalorder %s160, 31
        %s162 = scalar_select %p161, %s160, 31
        %s163 = smul.addr %s162, 4
        %s164 = scalar_lea.vmem %s0, %s163
        %p165 = pneg %p56
        %p166 = pneg %p53
        %s167 = smul.u32 2, %s23
        %p168 = scmp.lt.s32.totalorder %s21, 1
        %s169 = scalar_select %p168, %s21, 1
        %p170 = scmp.lt.s32.totalorder %s167, 1
        %s171 = scalar_select %p170, %s167, 1
        %s172 = smul.addr %s169, 8
        %s173 = sadd.s32 %s171, %s172
        %s174 = smul.addr %s173, 4
        %s175 = scalar_lea.vmem %s1, %s174
        %p176 = pneg %p84
        %p177 = pneg %p81
        %p178 = pneg %p112
        %p179 = pneg %p109
        %s180 = sand.u32 %s99, 1
        %s181 = scalar_lea.sflag [#allocation5], %s180
        %s182 = sand.u32 %s99, 1
        %s183 = smul.addr %s182, 2
        %s184 = scalar_lea.vmem [#allocation4], %s183
        %s185 = smul.u32 32, %s22
        %p186 = scmp.lt.s32.totalorder %s185, 31
        %s187 = scalar_select %p186, %s185, 31
        %s188 = smul.addr %s187, 4
        %s189 = scalar_lea.vmem %s0, %s188
        %s190 = smul.u32 32, %s22
        %s191 = smul.u32 2, %s23
        %p192 = scmp.lt.s32.totalorder %s21, 1
        %s193 = scalar_select %p192, %s21, 1
        %p194 = scmp.lt.s32.totalorder %s191, 1
        %s195 = scalar_select %p194, %s191, 1
        %s196 = smul.addr %s193, 8
        %s197 = sadd.s32 %s195, %s196
        %s198 = smul.addr %s197, 4
        %s199 = scalar_lea.vmem %s1, %s198
        %s200 = smul.u32 2, %s23
        %s201 = smul.u32 2, %s22
        %p203 = scmp.eq.s32.totalorder %s23, 0
        // Predicated region
        $region29: #{tpu_custom_call.1} parent=27 // pred_check
          %p204 = pneg %p203
        $region30: #{tpu_custom_call.1} parent=27 // pred_check_branch
          %206 = sbr.rel (%p204) target = $region32
        $region31: #{tpu_custom_call.1} parent=27 // pred_region
          %207 = vst [vmem:[#allocation2] sm:$0xff] 0.0
          %208 = vst [vmem:[#allocation2 + $0x8] sm:$0xff] 0.0
          %209 = vst [vmem:[#allocation2 + $0x10] sm:$0xff] 0.0
          %210 = vst [vmem:[#allocation2 + $0x18] sm:$0xff] 0.0
          %211 = vst [vmem:[#allocation2 + $0x20] sm:$0xff] 0.0
          %212 = vst [vmem:[#allocation2 + $0x28] sm:$0xff] 0.0
          %213 = vst [vmem:[#allocation2 + $0x30] sm:$0xff] 0.0
          %214 = vst [vmem:[#allocation2 + $0x38] sm:$0xff] 0.0
          %215 = vst [vmem:[#allocation2 + $0x40] sm:$0xff] 0.0
          %216 = vst [vmem:[#allocation2 + $0x48] sm:$0xff] 0.0
          %217 = vst [vmem:[#allocation2 + $0x50] sm:$0xff] 0.0
          %218 = vst [vmem:[#allocation2 + $0x58] sm:$0xff] 0.0
          %219 = vst [vmem:[#allocation2 + $0x60] sm:$0xff] 0.0
          %220 = vst [vmem:[#allocation2 + $0x68] sm:$0xff] 0.0
          %221 = vst [vmem:[#allocation2 + $0x70] sm:$0xff] 0.0
          %222 = vst [vmem:[#allocation2 + $0x78] sm:$0xff] 0.0
          %223 = vst [vmem:[#allocation2 + $0x80] sm:$0xff] 0.0
          %224 = vst [vmem:[#allocation2 + $0x88] sm:$0xff] 0.0
          %225 = vst [vmem:[#allocation2 + $0x90] sm:$0xff] 0.0
          %226 = vst [vmem:[#allocation2 + $0x98] sm:$0xff] 0.0
          %227 = vst [vmem:[#allocation2 + $0xa0] sm:$0xff] 0.0
          %228 = vst [vmem:[#allocation2 + $0xa8] sm:$0xff] 0.0
          %229 = vst [vmem:[#allocation2 + $0xb0] sm:$0xff] 0.0
          %230 = vst [vmem:[#allocation2 + $0xb8] sm:$0xff] 0.0
          %231 = vst [vmem:[#allocation2 + $0xc0] sm:$0xff] 0.0
          %232 = vst [vmem:[#allocation2 + $0xc8] sm:$0xff] 0.0
          %233 = vst [vmem:[#allocation2 + $0xd0] sm:$0xff] 0.0
          %234 = vst [vmem:[#allocation2 + $0xd8] sm:$0xff] 0.0
          %235 = vst [vmem:[#allocation2 + $0xe0] sm:$0xff] 0.0
          %236 = vst [vmem:[#allocation2 + $0xe8] sm:$0xff] 0.0
          %237 = vst [vmem:[#allocation2 + $0xf0] sm:$0xff] 0.0
          %238 = vst [vmem:[#allocation2 + $0xf8] sm:$0xff] 0.0
          %239 = vst [vmem:[#allocation3] sm:$0xff] -inf
          %240 = vst [vmem:[#allocation3 + $0x8] sm:$0xff] -inf
          %241 = vst [vmem:[#allocation3 + $0x10] sm:$0xff] -inf
          %242 = vst [vmem:[#allocation3 + $0x18] sm:$0xff] -inf
          %243 = vst [vmem:[#allocation3 + $0x20] sm:$0xff] -inf
          %244 = vst [vmem:[#allocation3 + $0x28] sm:$0xff] -inf
          %245 = vst [vmem:[#allocation3 + $0x30] sm:$0xff] -inf
          %246 = vst [vmem:[#allocation3 + $0x38] sm:$0xff] -inf
          %247 = vst [vmem:[#allocation3 + $0x40] sm:$0xff] -inf
          %248 = vst [vmem:[#allocation3 + $0x48] sm:$0xff] -inf
          %249 = vst [vmem:[#allocation3 + $0x50] sm:$0xff] -inf
          %250 = vst [vmem:[#allocation3 + $0x58] sm:$0xff] -inf
          %251 = vst [vmem:[#allocation3 + $0x60] sm:$0xff] -inf
          %252 = vst [vmem:[#allocation3 + $0x68] sm:$0xff] -inf
          %253 = vst [vmem:[#allocation3 + $0x70] sm:$0xff] -inf
          %254 = vst [vmem:[#allocation3 + $0x78] sm:$0xff] -inf
          %255 = vst [vmem:[#allocation3 + $0x80] sm:$0xff] -inf
          %256 = vst [vmem:[#allocation3 + $0x88] sm:$0xff] -inf
          %257 = vst [vmem:[#allocation3 + $0x90] sm:$0xff] -inf
          %258 = vst [vmem:[#allocation3 + $0x98] sm:$0xff] -inf
          %259 = vst [vmem:[#allocation3 + $0xa0] sm:$0xff] -inf
          %260 = vst [vmem:[#allocation3 + $0xa8] sm:$0xff] -inf
          %261 = vst [vmem:[#allocation3 + $0xb0] sm:$0xff] -inf
          %262 = vst [vmem:[#allocation3 + $0xb8] sm:$0xff] -inf
          %263 = vst [vmem:[#allocation3 + $0xc0] sm:$0xff] -inf
          %264 = vst [vmem:[#allocation3 + $0xc8] sm:$0xff] -inf
          %265 = vst [vmem:[#allocation3 + $0xd0] sm:$0xff] -inf
          %266 = vst [vmem:[#allocation3 + $0xd8] sm:$0xff] -inf
          %267 = vst [vmem:[#allocation3 + $0xe0] sm:$0xff] -inf
          %268 = vst [vmem:[#allocation3 + $0xe8] sm:$0xff] -inf
          %269 = vst [vmem:[#allocation3 + $0xf0] sm:$0xff] -inf
          %270 = vst [vmem:[#allocation3 + $0xf8] sm:$0xff] -inf
        $region32: #{tpu_custom_call.1} parent=27 // pred_fallthru
          _
        %v271 = vld [vmem:[%s189] sm:$0xf]
        %v272 = vld [vmem:[%s189 + $0x4] sm:$0xf]
        %v273 = vld [vmem:[%s189 + $0x8] sm:$0xf]
        %v274 = vld [vmem:[%s189 + $0xc] sm:$0xf]
        %v275 = vld [vmem:[%s189 + $0x10] sm:$0xf]
        %v276 = vld [vmem:[%s189 + $0x14] sm:$0xf]
        %v277 = vld [vmem:[%s189 + $0x18] sm:$0xf]
        %v278 = vld [vmem:[%s189 + $0x1c] sm:$0xf]
        %v279 = vld [vmem:[%s189 + $0x20] sm:$0xf]
        %v280 = vld [vmem:[%s189 + $0x24] sm:$0xf]
        %v281 = vld [vmem:[%s189 + $0x28] sm:$0xf]
        %v282 = vld [vmem:[%s189 + $0x2c] sm:$0xf]
        %v283 = vld [vmem:[%s189 + $0x30] sm:$0xf]
        %v284 = vld [vmem:[%s189 + $0x34] sm:$0xf]
        %v285 = vld [vmem:[%s189 + $0x38] sm:$0xf]
        %v286 = vld [vmem:[%s189 + $0x3c] sm:$0xf]
        %v287 = vld [vmem:[%s189 + $0x40] sm:$0xf]
        %v288 = vld [vmem:[%s189 + $0x44] sm:$0xf]
        %v289 = vld [vmem:[%s189 + $0x48] sm:$0xf]
        %v290 = vld [vmem:[%s189 + $0x4c] sm:$0xf]
        %v291 = vld [vmem:[%s189 + $0x50] sm:$0xf]
        %v292 = vld [vmem:[%s189 + $0x54] sm:$0xf]
        %v293 = vld [vmem:[%s189 + $0x58] sm:$0xf]
        %v294 = vld [vmem:[%s189 + $0x5c] sm:$0xf]
        %v295 = vld [vmem:[%s189 + $0x60] sm:$0xf]
        %v296 = vld [vmem:[%s189 + $0x64] sm:$0xf]
        %v297 = vld [vmem:[%s189 + $0x68] sm:$0xf]
        %v298 = vld [vmem:[%s189 + $0x6c] sm:$0xf]
        %v299 = vld [vmem:[%s189 + $0x70] sm:$0xf]
        %v300 = vld [vmem:[%s189 + $0x74] sm:$0xf]
        %v301 = vld [vmem:[%s189 + $0x78] sm:$0xf]
        %v302 = vld [vmem:[%s189 + $0x7c] sm:$0xf]
        %v303 = vld [vmem:[%s199] sm:$0xff]
        %v304 = vld [vmem:[%s199 + $0x8] sm:$0xff]
        %v305 = vld [vmem:[%s199 + $0x10] sm:$0xff]
        %v306 = vld [vmem:[%s199 + $0x18] sm:$0xff]
        %v339 = vunpack.c.l.b16 %v271
        %v340 = vunpack.c.l.b16 %v272
        %v341 = vunpack.c.l.b16 %v273
        %v342 = vunpack.c.l.b16 %v274
        %v343 = vunpack.c.l.b16 %v275
        %v344 = vunpack.c.l.b16 %v276
        %v345 = vunpack.c.l.b16 %v277
        %v346 = vunpack.c.l.b16 %v278
        %v347 = vunpack.c.l.b16 %v279
        %v348 = vunpack.c.l.b16 %v280
        %v349 = vunpack.c.l.b16 %v281
        %v350 = vunpack.c.l.b16 %v282
        %v351 = vunpack.c.l.b16 %v283
        %v352 = vunpack.c.l.b16 %v284
        %v353 = vunpack.c.l.b16 %v285
        %v354 = vunpack.c.l.b16 %v286
        %v355 = vunpack.c.l.b16 %v287
        %v356 = vunpack.c.l.b16 %v288
        %v357 = vunpack.c.l.b16 %v289
        %v358 = vunpack.c.l.b16 %v290
        %v359 = vunpack.c.l.b16 %v291
        %v360 = vunpack.c.l.b16 %v292
        %v361 = vunpack.c.l.b16 %v293
        %v362 = vunpack.c.l.b16 %v294
        %v363 = vunpack.c.l.b16 %v295
        %v364 = vunpack.c.l.b16 %v296
        %v365 = vunpack.c.l.b16 %v297
        %v366 = vunpack.c.l.b16 %v298
        %v367 = vunpack.c.l.b16 %v299
        %v368 = vunpack.c.l.b16 %v300
        %v369 = vunpack.c.l.b16 %v301
        %v370 = vunpack.c.l.b16 %v302
        %v371 = vpack.c.b16 %v340, %v339
        %v372 = vpack.c.b16 %v342, %v341
        %v373 = vpack.c.b16 %v344, %v343
        %v374 = vpack.c.b16 %v346, %v345
        %v375 = vpack.c.b16 %v348, %v347
        %v376 = vpack.c.b16 %v350, %v349
        %v377 = vpack.c.b16 %v352, %v351
        %v378 = vpack.c.b16 %v354, %v353
        %v379 = vpack.c.b16 %v356, %v355
        %v380 = vpack.c.b16 %v358, %v357
        %v381 = vpack.c.b16 %v360, %v359
        %v382 = vpack.c.b16 %v362, %v361
        %v383 = vpack.c.b16 %v364, %v363
        %v384 = vpack.c.b16 %v366, %v365
        %v385 = vpack.c.b16 %v368, %v367
        %v386 = vpack.c.b16 %v370, %v369
        %v391 = vunpack.c.l.b16 %v303
        %v392 = vunpack.c.h.b16 %v303
        %v393 = vunpack.c.l.b16 %v304
        %v394 = vunpack.c.h.b16 %v304
        %v395 = vunpack.c.l.b16 %v305
        %v396 = vunpack.c.h.b16 %v305
        %v397 = vunpack.c.l.b16 %v306
        %v398 = vunpack.c.h.b16 %v306
        %v399 = vpack.c.b16 %v393, %v391
        %v400 = vpack.c.b16 %v394, %v392
        %v401 = vpack.c.b16 %v397, %v395
        %v402 = vpack.c.b16 %v398, %v396
        %vm407 = vcmask 261120
        %v409 = vsel %vm407, %v371, 0
        %v412 = vsel %vm407, %v372, 0
        %v415 = vsel %vm407, %v373, 0
        %v418 = vsel %vm407, %v374, 0
        %v421 = vsel %vm407, %v375, 0
        %v424 = vsel %vm407, %v376, 0
        %v427 = vsel %vm407, %v377, 0
        %v430 = vsel %vm407, %v378, 0
        %v433 = vsel %vm407, %v379, 0
        %v436 = vsel %vm407, %v380, 0
        %v439 = vsel %vm407, %v381, 0
        %v442 = vsel %vm407, %v382, 0
        %v445 = vsel %vm407, %v383, 0
        %v448 = vsel %vm407, %v384, 0
        %v451 = vsel %vm407, %v385, 0
        %v454 = vsel %vm407, %v386, 0
        %456 = vmatpush.bf16.msra.mxu0 0
        %457 = vmatpush.bf16.msra.mxu0 0
        %458 = vmatpush.bf16.msra.mxu0 0
        %459 = vmatpush.bf16.msra.mxu0 0
        %460 = vmatpush.bf16.msra.mxu0 0
        %461 = vmatpush.bf16.msra.mxu0 0
        %462 = vmatpush.bf16.msra.mxu0 %v401
        %463 = vmatpush.bf16.msra.mxu0 %v399
        %464 = vmatmul.bf16.gmra.mxu0 %v409
        %v465 = vpop.f32.mrf.mxu0
        %v466 = vadd.f32 0.0, %v465
        %v467 = vpop.f32.mrf.mxu0
        %v468 = vadd.f32 0.0, %v467
        %469 = vmatmul.bf16.gmra.mxu0 %v412
        %v470 = vpop.f32.mrf.mxu0
        %v471 = vadd.f32 0.0, %v470
        %v472 = vpop.f32.mrf.mxu0
        %v473 = vadd.f32 0.0, %v472
        %474 = vmatmul.bf16.gmra.mxu0 %v415
        %v475 = vpop.f32.mrf.mxu0
        %v476 = vadd.f32 0.0, %v475
        %v477 = vpop.f32.mrf.mxu0
        %v478 = vadd.f32 0.0, %v477
        %479 = vmatmul.bf16.gmra.mxu0 %v418
        %v480 = vpop.f32.mrf.mxu0
        %v481 = vadd.f32 0.0, %v480
        %v482 = vpop.f32.mrf.mxu0
        %v483 = vadd.f32 0.0, %v482
        %484 = vmatmul.bf16.gmra.mxu0 %v421
        %v485 = vpop.f32.mrf.mxu0
        %v486 = vadd.f32 0.0, %v485
        %v487 = vpop.f32.mrf.mxu0
        %v488 = vadd.f32 0.0, %v487
        %489 = vmatmul.bf16.gmra.mxu0 %v424
        %v490 = vpop.f32.mrf.mxu0
        %v491 = vadd.f32 0.0, %v490
        %v492 = vpop.f32.mrf.mxu0
        %v493 = vadd.f32 0.0, %v492
        %494 = vmatmul.bf16.gmra.mxu0 %v427
        %v495 = vpop.f32.mrf.mxu0
        %v496 = vadd.f32 0.0, %v495
        %v497 = vpop.f32.mrf.mxu0
        %v498 = vadd.f32 0.0, %v497
        %499 = vmatmul.bf16.gmra.mxu0 %v430
        %v500 = vpop.f32.mrf.mxu0
        %v501 = vadd.f32 0.0, %v500
        %v502 = vpop.f32.mrf.mxu0
        %v503 = vadd.f32 0.0, %v502
        %504 = vmatmul.bf16.gmra.mxu0 %v433
        %v505 = vpop.f32.mrf.mxu0
        %v506 = vadd.f32 0.0, %v505
        %v507 = vpop.f32.mrf.mxu0
        %v508 = vadd.f32 0.0, %v507
        %509 = vmatmul.bf16.gmra.mxu0 %v436
        %v510 = vpop.f32.mrf.mxu0
        %v511 = vadd.f32 0.0, %v510
        %v512 = vpop.f32.mrf.mxu0
        %v513 = vadd.f32 0.0, %v512
        %514 = vmatmul.bf16.gmra.mxu0 %v439
        %v515 = vpop.f32.mrf.mxu0
        %v516 = vadd.f32 0.0, %v515
        %v517 = vpop.f32.mrf.mxu0
        %v518 = vadd.f32 0.0, %v517
        %519 = vmatmul.bf16.gmra.mxu0 %v442
        %v520 = vpop.f32.mrf.mxu0
        %v521 = vadd.f32 0.0, %v520
        %v522 = vpop.f32.mrf.mxu0
        %v523 = vadd.f32 0.0, %v522
        %524 = vmatmul.bf16.gmra.mxu0 %v445
        %v525 = vpop.f32.mrf.mxu0
        %v526 = vadd.f32 0.0, %v525
        %v527 = vpop.f32.mrf.mxu0
        %v528 = vadd.f32 0.0, %v527
        %529 = vmatmul.bf16.gmra.mxu0 %v448
        %v530 = vpop.f32.mrf.mxu0
        %v531 = vadd.f32 0.0, %v530
        %v532 = vpop.f32.mrf.mxu0
        %v533 = vadd.f32 0.0, %v532
        %534 = vmatmul.bf16.gmra.mxu0 %v451
        %v535 = vpop.f32.mrf.mxu0
        %v536 = vadd.f32 0.0, %v535
        %v537 = vpop.f32.mrf.mxu0
        %v538 = vadd.f32 0.0, %v537
        %539 = vmatmul.bf16.gmra.mxu0 %v454
        %v540 = vpop.f32.mrf.mxu0
        %v541 = vadd.f32 0.0, %v540
        %v542 = vpop.f32.mrf.mxu0
        %v543 = vadd.f32 0.0, %v542
        %544 = vdwg.mxu0
        %545 = vmatpush.bf16.msra.mxu0 0
        %546 = vmatpush.bf16.msra.mxu0 0
        %547 = vmatpush.bf16.msra.mxu0 0
        %548 = vmatpush.bf16.msra.mxu0 0
        %549 = vmatpush.bf16.msra.mxu0 0
        %550 = vmatpush.bf16.msra.mxu0 0
        %551 = vmatpush.bf16.msra.mxu0 %v402
        %552 = vmatpush.bf16.msra.mxu0 %v400
        %553 = vmatmul.bf16.gmra.mxu0 %v409
        %v554 = vpop.f32.mrf.mxu0
        %v555 = vadd.f32 0.0, %v554
        %v556 = vpop.f32.mrf.mxu0
        %v557 = vadd.f32 0.0, %v556
        %558 = vmatmul.bf16.gmra.mxu0 %v412
        %v559 = vpop.f32.mrf.mxu0
        %v560 = vadd.f32 0.0, %v559
        %v561 = vpop.f32.mrf.mxu0
        %v562 = vadd.f32 0.0, %v561
        %563 = vmatmul.bf16.gmra.mxu0 %v415
        %v564 = vpop.f32.mrf.mxu0
        %v565 = vadd.f32 0.0, %v564
        %v566 = vpop.f32.mrf.mxu0
        %v567 = vadd.f32 0.0, %v566
        %568 = vmatmul.bf16.gmra.mxu0 %v418
        %v569 = vpop.f32.mrf.mxu0
        %v570 = vadd.f32 0.0, %v569
        %v571 = vpop.f32.mrf.mxu0
        %v572 = vadd.f32 0.0, %v571
        %573 = vmatmul.bf16.gmra.mxu0 %v421
        %v574 = vpop.f32.mrf.mxu0
        %v575 = vadd.f32 0.0, %v574
        %v576 = vpop.f32.mrf.mxu0
        %v577 = vadd.f32 0.0, %v576
        %578 = vmatmul.bf16.gmra.mxu0 %v424
        %v579 = vpop.f32.mrf.mxu0
        %v580 = vadd.f32 0.0, %v579
        %v581 = vpop.f32.mrf.mxu0
        %v582 = vadd.f32 0.0, %v581
        %583 = vmatmul.bf16.gmra.mxu0 %v427
        %v584 = vpop.f32.mrf.mxu0
        %v585 = vadd.f32 0.0, %v584
        %v586 = vpop.f32.mrf.mxu0
        %v587 = vadd.f32 0.0, %v586
        %588 = vmatmul.bf16.gmra.mxu0 %v430
        %v589 = vpop.f32.mrf.mxu0
        %v590 = vadd.f32 0.0, %v589
        %v591 = vpop.f32.mrf.mxu0
        %v592 = vadd.f32 0.0, %v591
        %593 = vmatmul.bf16.gmra.mxu0 %v433
        %v594 = vpop.f32.mrf.mxu0
        %v595 = vadd.f32 0.0, %v594
        %v596 = vpop.f32.mrf.mxu0
        %v597 = vadd.f32 0.0, %v596
        %598 = vmatmul.bf16.gmra.mxu0 %v436
        %v599 = vpop.f32.mrf.mxu0
        %v600 = vadd.f32 0.0, %v599
        %v601 = vpop.f32.mrf.mxu0
        %v602 = vadd.f32 0.0, %v601
        %603 = vmatmul.bf16.gmra.mxu0 %v439
        %v604 = vpop.f32.mrf.mxu0
        %v605 = vadd.f32 0.0, %v604
        %v606 = vpop.f32.mrf.mxu0
        %v607 = vadd.f32 0.0, %v606
        %608 = vmatmul.bf16.gmra.mxu0 %v442
        %v609 = vpop.f32.mrf.mxu0
        %v610 = vadd.f32 0.0, %v609
        %v611 = vpop.f32.mrf.mxu0
        %v612 = vadd.f32 0.0, %v611
        %613 = vmatmul.bf16.gmra.mxu0 %v445
        %v614 = vpop.f32.mrf.mxu0
        %v615 = vadd.f32 0.0, %v614
        %v616 = vpop.f32.mrf.mxu0
        %v617 = vadd.f32 0.0, %v616
        %618 = vmatmul.bf16.gmra.mxu0 %v448
        %v619 = vpop.f32.mrf.mxu0
        %v620 = vadd.f32 0.0, %v619
        %v621 = vpop.f32.mrf.mxu0
        %v622 = vadd.f32 0.0, %v621
        %623 = vmatmul.bf16.gmra.mxu0 %v451
        %v624 = vpop.f32.mrf.mxu0
        %v625 = vadd.f32 0.0, %v624
        %v626 = vpop.f32.mrf.mxu0
        %v627 = vadd.f32 0.0, %v626
        %628 = vmatmul.bf16.gmra.mxu0 %v454
        %v629 = vpop.f32.mrf.mxu0
        %v630 = vadd.f32 0.0, %v629
        %v631 = vpop.f32.mrf.mxu0
        %v632 = vadd.f32 0.0, %v631
        %633 = vdwg.mxu0
        %v634 = vadd.f32 %v466, %v555
        %v635 = vadd.f32 %v468, %v557
        %v636 = vadd.f32 %v471, %v560
        %v637 = vadd.f32 %v473, %v562
        %v638 = vadd.f32 %v476, %v565
        %v639 = vadd.f32 %v478, %v567
        %v640 = vadd.f32 %v481, %v570
        %v641 = vadd.f32 %v483, %v572
        %v642 = vadd.f32 %v486, %v575
        %v643 = vadd.f32 %v488, %v577
        %v644 = vadd.f32 %v491, %v580
        %v645 = vadd.f32 %v493, %v582
        %v646 = vadd.f32 %v496, %v585
        %v647 = vadd.f32 %v498, %v587
        %v648 = vadd.f32 %v501, %v590
        %v649 = vadd.f32 %v503, %v592
        %v650 = vadd.f32 %v506, %v595
        %v651 = vadd.f32 %v508, %v597
        %v652 = vadd.f32 %v511, %v600
        %v653 = vadd.f32 %v513, %v602
        %v654 = vadd.f32 %v516, %v605
        %v655 = vadd.f32 %v518, %v607
        %v656 = vadd.f32 %v521, %v610
        %v657 = vadd.f32 %v523, %v612
        %v658 = vadd.f32 %v526, %v615
        %v659 = vadd.f32 %v528, %v617
        %v660 = vadd.f32 %v531, %v620
        %v661 = vadd.f32 %v533, %v622
        %v662 = vadd.f32 %v536, %v625
        %v663 = vadd.f32 %v538, %v627
        %v664 = vadd.f32 %v541, %v630
        %v665 = vadd.f32 %v543, %v632
        %v666 = vmax.f32 %v466, %v555
        %v667 = vmax.f32 %v468, %v557
        %v668 = vmax.f32 %v471, %v560
        %v669 = vmax.f32 %v473, %v562
        %v670 = vmax.f32 %v476, %v565
        %v671 = vmax.f32 %v478, %v567
        %v672 = vmax.f32 %v481, %v570
        %v673 = vmax.f32 %v483, %v572
        %v674 = vmax.f32 %v486, %v575
        %v675 = vmax.f32 %v488, %v577
        %v676 = vmax.f32 %v491, %v580
        %v677 = vmax.f32 %v493, %v582
        %v678 = vmax.f32 %v496, %v585
        %v679 = vmax.f32 %v498, %v587
        %v680 = vmax.f32 %v501, %v590
        %v681 = vmax.f32 %v503, %v592
        %v682 = vmax.f32 %v506, %v595
        %v683 = vmax.f32 %v508, %v597
        %v684 = vmax.f32 %v511, %v600
        %v685 = vmax.f32 %v513, %v602
        %v686 = vmax.f32 %v516, %v605
        %v687 = vmax.f32 %v518, %v607
        %v688 = vmax.f32 %v521, %v610
        %v689 = vmax.f32 %v523, %v612
        %v690 = vmax.f32 %v526, %v615
        %v691 = vmax.f32 %v528, %v617
        %v692 = vmax.f32 %v531, %v620
        %v693 = vmax.f32 %v533, %v622
        %v694 = vmax.f32 %v536, %v625
        %v695 = vmax.f32 %v538, %v627
        %v696 = vmax.f32 %v541, %v630
        %v697 = vmax.f32 %v543, %v632
        %v698 = vld [vmem:[#allocation2] sm:$0xff]
        %v699 = vld [vmem:[#allocation2 + $0x8] sm:$0xff]
        %v700 = vld [vmem:[#allocation2 + $0x10] sm:$0xff]
        %v701 = vld [vmem:[#allocation2 + $0x18] sm:$0xff]
        %v702 = vld [vmem:[#allocation2 + $0x20] sm:$0xff]
        %v703 = vld [vmem:[#allocation2 + $0x28] sm:$0xff]
        %v704 = vld [vmem:[#allocation2 + $0x30] sm:$0xff]
        %v705 = vld [vmem:[#allocation2 + $0x38] sm:$0xff]
        %v706 = vld [vmem:[#allocation2 + $0x40] sm:$0xff]
        %v707 = vld [vmem:[#allocation2 + $0x48] sm:$0xff]
        %v708 = vld [vmem:[#allocation2 + $0x50] sm:$0xff]
        %v709 = vld [vmem:[#allocation2 + $0x58] sm:$0xff]
        %v710 = vld [vmem:[#allocation2 + $0x60] sm:$0xff]
        %v711 = vld [vmem:[#allocation2 + $0x68] sm:$0xff]
        %v712 = vld [vmem:[#allocation2 + $0x70] sm:$0xff]
        %v713 = vld [vmem:[#allocation2 + $0x78] sm:$0xff]
        %v714 = vld [vmem:[#allocation2 + $0x80] sm:$0xff]
        %v715 = vld [vmem:[#allocation2 + $0x88] sm:$0xff]
        %v716 = vld [vmem:[#allocation2 + $0x90] sm:$0xff]
        %v717 = vld [vmem:[#allocation2 + $0x98] sm:$0xff]
        %v718 = vld [vmem:[#allocation2 + $0xa0] sm:$0xff]
        %v719 = vld [vmem:[#allocation2 + $0xa8] sm:$0xff]
        %v720 = vld [vmem:[#allocation2 + $0xb0] sm:$0xff]
        %v721 = vld [vmem:[#allocation2 + $0xb8] sm:$0xff]
        %v722 = vld [vmem:[#allocation2 + $0xc0] sm:$0xff]
        %v723 = vld [vmem:[#allocation2 + $0xc8] sm:$0xff]
        %v724 = vld [vmem:[#allocation2 + $0xd0] sm:$0xff]
        %v725 = vld [vmem:[#allocation2 + $0xd8] sm:$0xff]
        %v726 = vld [vmem:[#allocation2 + $0xe0] sm:$0xff]
        %v727 = vld [vmem:[#allocation2 + $0xe8] sm:$0xff]
        %v728 = vld [vmem:[#allocation2 + $0xf0] sm:$0xff]
        %v729 = vld [vmem:[#allocation2 + $0xf8] sm:$0xff]
        %v730 = vadd.f32 %v698, %v634
        %v731 = vadd.f32 %v699, %v635
        %v732 = vadd.f32 %v700, %v636
        %v733 = vadd.f32 %v701, %v637
        %v734 = vadd.f32 %v702, %v638
        %v735 = vadd.f32 %v703, %v639
        %v736 = vadd.f32 %v704, %v640
        %v737 = vadd.f32 %v705, %v641
        %v738 = vadd.f32 %v706, %v642
        %v739 = vadd.f32 %v707, %v643
        %v740 = vadd.f32 %v708, %v644
        %v741 = vadd.f32 %v709, %v645
        %v742 = vadd.f32 %v710, %v646
        %v743 = vadd.f32 %v711, %v647
        %v744 = vadd.f32 %v712, %v648
        %v745 = vadd.f32 %v713, %v649
        %v746 = vadd.f32 %v714, %v650
        %v747 = vadd.f32 %v715, %v651
        %v748 = vadd.f32 %v716, %v652
        %v749 = vadd.f32 %v717, %v653
        %v750 = vadd.f32 %v718, %v654
        %v751 = vadd.f32 %v719, %v655
        %v752 = vadd.f32 %v720, %v656
        %v753 = vadd.f32 %v721, %v657
        %v754 = vadd.f32 %v722, %v658
        %v755 = vadd.f32 %v723, %v659
        %v756 = vadd.f32 %v724, %v660
        %v757 = vadd.f32 %v725, %v661
        %v758 = vadd.f32 %v726, %v662
        %v759 = vadd.f32 %v727, %v663
        %v760 = vadd.f32 %v728, %v664
        %v761 = vadd.f32 %v729, %v665
        %762 = vst [vmem:[#allocation2] sm:$0xff] %v730
        %763 = vst [vmem:[#allocation2 + $0x8] sm:$0xff] %v731
        %764 = vst [vmem:[#allocation2 + $0x10] sm:$0xff] %v732
        %765 = vst [vmem:[#allocation2 + $0x18] sm:$0xff] %v733
        %766 = vst [vmem:[#allocation2 + $0x20] sm:$0xff] %v734
        %767 = vst [vmem:[#allocation2 + $0x28] sm:$0xff] %v735
        %768 = vst [vmem:[#allocation2 + $0x30] sm:$0xff] %v736
        %769 = vst [vmem:[#allocation2 + $0x38] sm:$0xff] %v737
        %770 = vst [vmem:[#allocation2 + $0x40] sm:$0xff] %v738
        %771 = vst [vmem:[#allocation2 + $0x48] sm:$0xff] %v739
        %772 = vst [vmem:[#allocation2 + $0x50] sm:$0xff] %v740
        %773 = vst [vmem:[#allocation2 + $0x58] sm:$0xff] %v741
        %774 = vst [vmem:[#allocation2 + $0x60] sm:$0xff] %v742
        %775 = vst [vmem:[#allocation2 + $0x68] sm:$0xff] %v743
        %776 = vst [vmem:[#allocation2 + $0x70] sm:$0xff] %v744
        %777 = vst [vmem:[#allocation2 + $0x78] sm:$0xff] %v745
        %778 = vst [vmem:[#allocation2 + $0x80] sm:$0xff] %v746
        %779 = vst [vmem:[#allocation2 + $0x88] sm:$0xff] %v747
        %780 = vst [vmem:[#allocation2 + $0x90] sm:$0xff] %v748
        %781 = vst [vmem:[#allocation2 + $0x98] sm:$0xff] %v749
        %782 = vst [vmem:[#allocation2 + $0xa0] sm:$0xff] %v750
        %783 = vst [vmem:[#allocation2 + $0xa8] sm:$0xff] %v751
        %784 = vst [vmem:[#allocation2 + $0xb0] sm:$0xff] %v752
        %785 = vst [vmem:[#allocation2 + $0xb8] sm:$0xff] %v753
        %786 = vst [vmem:[#allocation2 + $0xc0] sm:$0xff] %v754
        %787 = vst [vmem:[#allocation2 + $0xc8] sm:$0xff] %v755
        %788 = vst [vmem:[#allocation2 + $0xd0] sm:$0xff] %v756
        %789 = vst [vmem:[#allocation2 + $0xd8] sm:$0xff] %v757
        %790 = vst [vmem:[#allocation2 + $0xe0] sm:$0xff] %v758
        %791 = vst [vmem:[#allocation2 + $0xe8] sm:$0xff] %v759
        %792 = vst [vmem:[#allocation2 + $0xf0] sm:$0xff] %v760
        %793 = vst [vmem:[#allocation2 + $0xf8] sm:$0xff] %v761
        %v794 = vld [vmem:[#allocation3] sm:$0xff]
        %v795 = vld [vmem:[#allocation3 + $0x8] sm:$0xff]
        %v796 = vld [vmem:[#allocation3 + $0x10] sm:$0xff]
        %v797 = vld [vmem:[#allocation3 + $0x18] sm:$0xff]
        %v798 = vld [vmem:[#allocation3 + $0x20] sm:$0xff]
        %v799 = vld [vmem:[#allocation3 + $0x28] sm:$0xff]
        %v800 = vld [vmem:[#allocation3 + $0x30] sm:$0xff]
        %v801 = vld [vmem:[#allocation3 + $0x38] sm:$0xff]
        %v802 = vld [vmem:[#allocation3 + $0x40] sm:$0xff]
        %v803 = vld [vmem:[#allocation3 + $0x48] sm:$0xff]
        %v804 = vld [vmem:[#allocation3 + $0x50] sm:$0xff]
        %v805 = vld [vmem:[#allocation3 + $0x58] sm:$0xff]
        %v806 = vld [vmem:[#allocation3 + $0x60] sm:$0xff]
        %v807 = vld [vmem:[#allocation3 + $0x68] sm:$0xff]
        %v808 = vld [vmem:[#allocation3 + $0x70] sm:$0xff]
        %v809 = vld [vmem:[#allocation3 + $0x78] sm:$0xff]
        %v810 = vld [vmem:[#allocation3 + $0x80] sm:$0xff]
        %v811 = vld [vmem:[#allocation3 + $0x88] sm:$0xff]
        %v812 = vld [vmem:[#allocation3 + $0x90] sm:$0xff]
        %v813 = vld [vmem:[#allocation3 + $0x98] sm:$0xff]
        %v814 = vld [vmem:[#allocation3 + $0xa0] sm:$0xff]
        %v815 = vld [vmem:[#allocation3 + $0xa8] sm:$0xff]
        %v816 = vld [vmem:[#allocation3 + $0xb0] sm:$0xff]
        %v817 = vld [vmem:[#allocation3 + $0xb8] sm:$0xff]
        %v818 = vld [vmem:[#allocation3 + $0xc0] sm:$0xff]
        %v819 = vld [vmem:[#allocation3 + $0xc8] sm:$0xff]
        %v820 = vld [vmem:[#allocation3 + $0xd0] sm:$0xff]
        %v821 = vld [vmem:[#allocation3 + $0xd8] sm:$0xff]
        %v822 = vld [vmem:[#allocation3 + $0xe0] sm:$0xff]
        %v823 = vld [vmem:[#allocation3 + $0xe8] sm:$0xff]
        %v824 = vld [vmem:[#allocation3 + $0xf0] sm:$0xff]
        %v825 = vld [vmem:[#allocation3 + $0xf8] sm:$0xff]
        %v826 = vmax.f32 %v794, %v666
        %v827 = vmax.f32 %v795, %v667
        %v828 = vmax.f32 %v796, %v668
        %v829 = vmax.f32 %v797, %v669
        %v830 = vmax.f32 %v798, %v670
        %v831 = vmax.f32 %v799, %v671
        %v832 = vmax.f32 %v800, %v672
        %v833 = vmax.f32 %v801, %v673
        %v834 = vmax.f32 %v802, %v674
        %v835 = vmax.f32 %v803, %v675
        %v836 = vmax.f32 %v804, %v676
        %v837 = vmax.f32 %v805, %v677
        %v838 = vmax.f32 %v806, %v678
        %v839 = vmax.f32 %v807, %v679
        %v840 = vmax.f32 %v808, %v680
        %v841 = vmax.f32 %v809, %v681
        %v842 = vmax.f32 %v810, %v682
        %v843 = vmax.f32 %v811, %v683
        %v844 = vmax.f32 %v812, %v684
        %v845 = vmax.f32 %v813, %v685
        %v846 = vmax.f32 %v814, %v686
        %v847 = vmax.f32 %v815, %v687
        %v848 = vmax.f32 %v816, %v688
        %v849 = vmax.f32 %v817, %v689
        %v850 = vmax.f32 %v818, %v690
        %v851 = vmax.f32 %v819, %v691
        %v852 = vmax.f32 %v820, %v692
        %v853 = vmax.f32 %v821, %v693
        %v854 = vmax.f32 %v822, %v694
        %v855 = vmax.f32 %v823, %v695
        %v856 = vmax.f32 %v824, %v696
        %v857 = vmax.f32 %v825, %v697
        %858 = vst [vmem:[#allocation3] sm:$0xff] %v826
        %859 = vst [vmem:[#allocation3 + $0x8] sm:$0xff] %v827
        %860 = vst [vmem:[#allocation3 + $0x10] sm:$0xff] %v828
        %861 = vst [vmem:[#allocation3 + $0x18] sm:$0xff] %v829
        %862 = vst [vmem:[#allocation3 + $0x20] sm:$0xff] %v830
        %863 = vst [vmem:[#allocation3 + $0x28] sm:$0xff] %v831
        %864 = vst [vmem:[#allocation3 + $0x30] sm:$0xff] %v832
        %865 = vst [vmem:[#allocation3 + $0x38] sm:$0xff] %v833
        %866 = vst [vmem:[#allocation3 + $0x40] sm:$0xff] %v834
        %867 = vst [vmem:[#allocation3 + $0x48] sm:$0xff] %v835
        %868 = vst [vmem:[#allocation3 + $0x50] sm:$0xff] %v836
        %869 = vst [vmem:[#allocation3 + $0x58] sm:$0xff] %v837
        %870 = vst [vmem:[#allocation3 + $0x60] sm:$0xff] %v838
        %871 = vst [vmem:[#allocation3 + $0x68] sm:$0xff] %v839
        %872 = vst [vmem:[#allocation3 + $0x70] sm:$0xff] %v840
        %873 = vst [vmem:[#allocation3 + $0x78] sm:$0xff] %v841
        %874 = vst [vmem:[#allocation3 + $0x80] sm:$0xff] %v842
        %875 = vst [vmem:[#allocation3 + $0x88] sm:$0xff] %v843
        %876 = vst [vmem:[#allocation3 + $0x90] sm:$0xff] %v844
        %877 = vst [vmem:[#allocation3 + $0x98] sm:$0xff] %v845
        %878 = vst [vmem:[#allocation3 + $0xa0] sm:$0xff] %v846
        %879 = vst [vmem:[#allocation3 + $0xa8] sm:$0xff] %v847
        %880 = vst [vmem:[#allocation3 + $0xb0] sm:$0xff] %v848
        %881 = vst [vmem:[#allocation3 + $0xb8] sm:$0xff] %v849
        %882 = vst [vmem:[#allocation3 + $0xc0] sm:$0xff] %v850
        %883 = vst [vmem:[#allocation3 + $0xc8] sm:$0xff] %v851
        %884 = vst [vmem:[#allocation3 + $0xd0] sm:$0xff] %v852
        %885 = vst [vmem:[#allocation3 + $0xd8] sm:$0xff] %v853
        %886 = vst [vmem:[#allocation3 + $0xe0] sm:$0xff] %v854
        %887 = vst [vmem:[#allocation3 + $0xe8] sm:$0xff] %v855
        %888 = vst [vmem:[#allocation3 + $0xf0] sm:$0xff] %v856
        %889 = vst [vmem:[#allocation3 + $0xf8] sm:$0xff] %v857
        // Predicated region
        $region33: #{tpu_custom_call.1} parent=27 // pred_check
          %p890 = pneg %p203
        $region34: #{tpu_custom_call.1} parent=27 // pred_check_branch
          %892 = sbr.rel (%p890) target = $region36
        $region35: #{tpu_custom_call.1} parent=27 // pred_region
          %v893 = vld [vmem:[#allocation2] sm:$0xff]
          %v894 = vld [vmem:[#allocation2 + $0x8] sm:$0xff]
          %v895 = vld [vmem:[#allocation2 + $0x10] sm:$0xff]
          %v896 = vld [vmem:[#allocation2 + $0x18] sm:$0xff]
          %v897 = vld [vmem:[#allocation2 + $0x20] sm:$0xff]
          %v898 = vld [vmem:[#allocation2 + $0x28] sm:$0xff]
          %v899 = vld [vmem:[#allocation2 + $0x30] sm:$0xff]
          %v900 = vld [vmem:[#allocation2 + $0x38] sm:$0xff]
          %v901 = vld [vmem:[#allocation2 + $0x40] sm:$0xff]
          %v902 = vld [vmem:[#allocation2 + $0x48] sm:$0xff]
          %v903 = vld [vmem:[#allocation2 + $0x50] sm:$0xff]
          %v904 = vld [vmem:[#allocation2 + $0x58] sm:$0xff]
          %v905 = vld [vmem:[#allocation2 + $0x60] sm:$0xff]
          %v906 = vld [vmem:[#allocation2 + $0x68] sm:$0xff]
          %v907 = vld [vmem:[#allocation2 + $0x70] sm:$0xff]
          %v908 = vld [vmem:[#allocation2 + $0x78] sm:$0xff]
          %v909 = vld [vmem:[#allocation2 + $0x80] sm:$0xff]
          %v910 = vld [vmem:[#allocation2 + $0x88] sm:$0xff]
          %v911 = vld [vmem:[#allocation2 + $0x90] sm:$0xff]
          %v912 = vld [vmem:[#allocation2 + $0x98] sm:$0xff]
          %v913 = vld [vmem:[#allocation2 + $0xa0] sm:$0xff]
          %v914 = vld [vmem:[#allocation2 + $0xa8] sm:$0xff]
          %v915 = vld [vmem:[#allocation2 + $0xb0] sm:$0xff]
          %v916 = vld [vmem:[#allocation2 + $0xb8] sm:$0xff]
          %v917 = vld [vmem:[#allocation2 + $0xc0] sm:$0xff]
          %v918 = vld [vmem:[#allocation2 + $0xc8] sm:$0xff]
          %v919 = vld [vmem:[#allocation2 + $0xd0] sm:$0xff]
          %v920 = vld [vmem:[#allocation2 + $0xd8] sm:$0xff]
          %v921 = vld [vmem:[#allocation2 + $0xe0] sm:$0xff]
          %v922 = vld [vmem:[#allocation2 + $0xe8] sm:$0xff]
          %v923 = vld [vmem:[#allocation2 + $0xf0] sm:$0xff]
          %v924 = vld [vmem:[#allocation2 + $0xf8] sm:$0xff]
          %925 = vxpose.xlu0.b32.start [1/16] %v893, 128
          %926 = vxpose.xlu0.b32.cont [2/16] %v894, 128
          %927 = vxpose.xlu0.b32.cont [3/16] %v895, 128
          %928 = vxpose.xlu0.b32.cont [4/16] %v896, 128
          %929 = vxpose.xlu0.b32.cont [5/16] %v897, 128
          %930 = vxpose.xlu0.b32.cont [6/16] %v898, 128
          %931 = vxpose.xlu0.b32.cont [7/16] %v899, 128
          %932 = vxpose.xlu0.b32.cont [8/16] %v900, 128
          %933 = vxpose.xlu0.b32.cont [9/16] %v901, 128
          %934 = vxpose.xlu0.b32.cont [10/16] %v902, 128
          %935 = vxpose.xlu0.b32.cont [11/16] %v903, 128
          %936 = vxpose.xlu0.b32.cont [12/16] %v904, 128
          %937 = vxpose.xlu0.b32.cont [13/16] %v905, 128
          %938 = vxpose.xlu0.b32.cont [14/16] %v906, 128
          %939 = vxpose.xlu0.b32.cont [15/16] %v907, 128
          %940 = vxpose.xlu0.b32.end [16/16] %v908, 128
          %v941 = vpop.trf.xlu0
          %v942 = vpop.trf.xlu0
          %v943 = vpop.trf.xlu0
          %v944 = vpop.trf.xlu0
          %v945 = vpop.trf.xlu0
          %v946 = vpop.trf.xlu0
          %v947 = vpop.trf.xlu0
          %v948 = vpop.trf.xlu0
          %v949 = vpop.trf.xlu0
          %v950 = vpop.trf.xlu0
          %v951 = vpop.trf.xlu0
          %v952 = vpop.trf.xlu0
          %v953 = vpop.trf.xlu0
          %v954 = vpop.trf.xlu0
          %v955 = vpop.trf.xlu0
          %v956 = vpop.trf.xlu0
          %957 = vxpose.xlu0.b32.start [1/16] %v909, 128
          %958 = vxpose.xlu0.b32.cont [2/16] %v910, 128
          %959 = vxpose.xlu0.b32.cont [3/16] %v911, 128
          %960 = vxpose.xlu0.b32.cont [4/16] %v912, 128
          %961 = vxpose.xlu0.b32.cont [5/16] %v913, 128
          %962 = vxpose.xlu0.b32.cont [6/16] %v914, 128
          %963 = vxpose.xlu0.b32.cont [7/16] %v915, 128
          %964 = vxpose.xlu0.b32.cont [8/16] %v916, 128
          %965 = vxpose.xlu0.b32.cont [9/16] %v917, 128
          %966 = vxpose.xlu0.b32.cont [10/16] %v918, 128
          %967 = vxpose.xlu0.b32.cont [11/16] %v919, 128
          %968 = vxpose.xlu0.b32.cont [12/16] %v920, 128
          %969 = vxpose.xlu0.b32.cont [13/16] %v921, 128
          %970 = vxpose.xlu0.b32.cont [14/16] %v922, 128
          %971 = vxpose.xlu0.b32.cont [15/16] %v923, 128
          %972 = vxpose.xlu0.b32.end [16/16] %v924, 128
          %v973 = vpop.trf.xlu0
          %v974 = vpop.trf.xlu0
          %v975 = vpop.trf.xlu0
          %v976 = vpop.trf.xlu0
          %v977 = vpop.trf.xlu0
          %v978 = vpop.trf.xlu0
          %v979 = vpop.trf.xlu0
          %v980 = vpop.trf.xlu0
          %v981 = vpop.trf.xlu0
          %v982 = vpop.trf.xlu0
          %v983 = vpop.trf.xlu0
          %v984 = vpop.trf.xlu0
          %v985 = vpop.trf.xlu0
          %v986 = vpop.trf.xlu0
          %v987 = vpop.trf.xlu0
          %v988 = vpop.trf.xlu0
          %v989 = vadd.f32 %v941, %v942
          %v990 = vadd.f32 %v989, %v943
          %v991 = vadd.f32 %v990, %v944
          %v992 = vadd.f32 %v991, %v945
          %v993 = vadd.f32 %v992, %v946
          %v994 = vadd.f32 %v993, %v947
          %v995 = vadd.f32 %v994, %v948
          %v996 = vadd.f32 %v995, %v949
          %v997 = vadd.f32 %v996, %v950
          %v998 = vadd.f32 %v997, %v951
          %v999 = vadd.f32 %v998, %v952
          %v1000 = vadd.f32 %v999, %v953
          %v1001 = vadd.f32 %v1000, %v954
          %v1002 = vadd.f32 %v1001, %v955
          %v1003 = vadd.f32 %v1002, %v956
          %v1004 = vrot.slane %v1003, 4
          %v1005 = vadd.f32 %v1003, %v1004
          %v1006 = vrot.slane %v1005, 2
          %v1007 = vadd.f32 %v1005, %v1006
          %v1008 = vrot.slane %v1007, 1
          %v1009 = vadd.f32 %v1007, %v1008
          %v1010 = vadd.f32 %v973, %v974
          %v1011 = vadd.f32 %v1010, %v975
          %v1012 = vadd.f32 %v1011, %v976
          %v1013 = vadd.f32 %v1012, %v977
          %v1014 = vadd.f32 %v1013, %v978
          %v1015 = vadd.f32 %v1014, %v979
          %v1016 = vadd.f32 %v1015, %v980
          %v1017 = vadd.f32 %v1016, %v981
          %v1018 = vadd.f32 %v1017, %v982
          %v1019 = vadd.f32 %v1018, %v983
          %v1020 = vadd.f32 %v1019, %v984
          %v1021 = vadd.f32 %v1020, %v985
          %v1022 = vadd.f32 %v1021, %v986
          %v1023 = vadd.f32 %v1022, %v987
          %v1024 = vadd.f32 %v1023, %v988
          %v1025 = vrot.slane %v1024, 4
          %v1026 = vadd.f32 %v1024, %v1025
          %v1027 = vrot.slane %v1026, 2
          %v1028 = vadd.f32 %v1026, %v1027
          %v1029 = vrot.slane %v1028, 1
          %v1030 = vadd.f32 %v1028, %v1029
          %v1031 = vld [vmem:[#allocation3] sm:$0xff]
          %v1032 = vld [vmem:[#allocation3 + $0x8] sm:$0xff]
          %v1033 = vld [vmem:[#allocation3 + $0x10] sm:$0xff]
          %v1034 = vld [vmem:[#allocation3 + $0x18] sm:$0xff]
          %v1035 = vld [vmem:[#allocation3 + $0x20] sm:$0xff]
          %v1036 = vld [vmem:[#allocation3 + $0x28] sm:$0xff]
          %v1037 = vld [vmem:[#allocation3 + $0x30] sm:$0xff]
          %v1038 = vld [vmem:[#allocation3 + $0x38] sm:$0xff]
          %v1039 = vld [vmem:[#allocation3 + $0x40] sm:$0xff]
          %v1040 = vld [vmem:[#allocation3 + $0x48] sm:$0xff]
          %v1041 = vld [vmem:[#allocation3 + $0x50] sm:$0xff]
          %v1042 = vld [vmem:[#allocation3 + $0x58] sm:$0xff]
          %v1043 = vld [vmem:[#allocation3 + $0x60] sm:$0xff]
          %v1044 = vld [vmem:[#allocation3 + $0x68] sm:$0xff]
          %v1045 = vld [vmem:[#allocation3 + $0x70] sm:$0xff]
          %v1046 = vld [vmem:[#allocation3 + $0x78] sm:$0xff]
          %v1047 = vld [vmem:[#allocation3 + $0x80] sm:$0xff]
          %v1048 = vld [vmem:[#allocation3 + $0x88] sm:$0xff]
          %v1049 = vld [vmem:[#allocation3 + $0x90] sm:$0xff]
          %v1050 = vld [vmem:[#allocation3 + $0x98] sm:$0xff]
          %v1051 = vld [vmem:[#allocation3 + $0xa0] sm:$0xff]
          %v1052 = vld [vmem:[#allocation3 + $0xa8] sm:$0xff]
          %v1053 = vld [vmem:[#allocation3 + $0xb0] sm:$0xff]
          %v1054 = vld [vmem:[#allocation3 + $0xb8] sm:$0xff]
          %v1055 = vld [vmem:[#allocation3 + $0xc0] sm:$0xff]
          %v1056 = vld [vmem:[#allocation3 + $0xc8] sm:$0xff]
          %v1057 = vld [vmem:[#allocation3 + $0xd0] sm:$0xff]
          %v1058 = vld [vmem:[#allocation3 + $0xd8] sm:$0xff]
          %v1059 = vld [vmem:[#allocation3 + $0xe0] sm:$0xff]
          %v1060 = vld [vmem:[#allocation3 + $0xe8] sm:$0xff]
          %v1061 = vld [vmem:[#allocation3 + $0xf0] sm:$0xff]
          %v1062 = vld [vmem:[#allocation3 + $0xf8] sm:$0xff]
          %1063 = vxpose.xlu0.b32.start [1/16] %v1031, 128
          %1064 = vxpose.xlu0.b32.cont [2/16] %v1032, 128
          %1065 = vxpose.xlu0.b32.cont [3/16] %v1033, 128
          %1066 = vxpose.xlu0.b32.cont [4/16] %v1034, 128
          %1067 = vxpose.xlu0.b32.cont [5/16] %v1035, 128
          %1068 = vxpose.xlu0.b32.cont [6/16] %v1036, 128
          %1069 = vxpose.xlu0.b32.cont [7/16] %v1037, 128
          %1070 = vxpose.xlu0.b32.cont [8/16] %v1038, 128
          %1071 = vxpose.xlu0.b32.cont [9/16] %v1039, 128
          %1072 = vxpose.xlu0.b32.cont [10/16] %v1040, 128
          %1073 = vxpose.xlu0.b32.cont [11/16] %v1041, 128
          %1074 = vxpose.xlu0.b32.cont [12/16] %v1042, 128
          %1075 = vxpose.xlu0.b32.cont [13/16] %v1043, 128
          %1076 = vxpose.xlu0.b32.cont [14/16] %v1044, 128
          %1077 = vxpose.xlu0.b32.cont [15/16] %v1045, 128
          %1078 = vxpose.xlu0.b32.end [16/16] %v1046, 128
          %v1079 = vpop.trf.xlu0
          %v1080 = vpop.trf.xlu0
          %v1081 = vpop.trf.xlu0
          %v1082 = vpop.trf.xlu0
          %v1083 = vpop.trf.xlu0
          %v1084 = vpop.trf.xlu0
          %v1085 = vpop.trf.xlu0
          %v1086 = vpop.trf.xlu0
          %v1087 = vpop.trf.xlu0
          %v1088 = vpop.trf.xlu0
          %v1089 = vpop.trf.xlu0
          %v1090 = vpop.trf.xlu0
          %v1091 = vpop.trf.xlu0
          %v1092 = vpop.trf.xlu0
          %v1093 = vpop.trf.xlu0
          %v1094 = vpop.trf.xlu0
          %1095 = vxpose.xlu0.b32.start [1/16] %v1047, 128
          %1096 = vxpose.xlu0.b32.cont [2/16] %v1048, 128
          %1097 = vxpose.xlu0.b32.cont [3/16] %v1049, 128
          %1098 = vxpose.xlu0.b32.cont [4/16] %v1050, 128
          %1099 = vxpose.xlu0.b32.cont [5/16] %v1051, 128
          %1100 = vxpose.xlu0.b32.cont [6/16] %v1052, 128
          %1101 = vxpose.xlu0.b32.cont [7/16] %v1053, 128
          %1102 = vxpose.xlu0.b32.cont [8/16] %v1054, 128
          %1103 = vxpose.xlu0.b32.cont [9/16] %v1055, 128
          %1104 = vxpose.xlu0.b32.cont [10/16] %v1056, 128
          %1105 = vxpose.xlu0.b32.cont [11/16] %v1057, 128
          %1106 = vxpose.xlu0.b32.cont [12/16] %v1058, 128
          %1107 = vxpose.xlu0.b32.cont [13/16] %v1059, 128
          %1108 = vxpose.xlu0.b32.cont [14/16] %v1060, 128
          %1109 = vxpose.xlu0.b32.cont [15/16] %v1061, 128
          %1110 = vxpose.xlu0.b32.end [16/16] %v1062, 128
          %v1111 = vpop.trf.xlu0
          %v1112 = vpop.trf.xlu0
          %v1113 = vpop.trf.xlu0
          %v1114 = vpop.trf.xlu0
          %v1115 = vpop.trf.xlu0
          %v1116 = vpop.trf.xlu0
          %v1117 = vpop.trf.xlu0
          %v1118 = vpop.trf.xlu0
          %v1119 = vpop.trf.xlu0
          %v1120 = vpop.trf.xlu0
          %v1121 = vpop.trf.xlu0
          %v1122 = vpop.trf.xlu0
          %v1123 = vpop.trf.xlu0
          %v1124 = vpop.trf.xlu0
          %v1125 = vpop.trf.xlu0
          %v1126 = vpop.trf.xlu0
          %v1127 = vmax.f32 %v1079, %v1081
          %v1128 = vmax.f32 %v1080, %v1082
          %v1129 = vmax.f32 %v1127, %v1083
          %v1130 = vmax.f32 %v1128, %v1084
          %v1131 = vmax.f32 %v1129, %v1085
          %v1132 = vmax.f32 %v1130, %v1086
          %v1133 = vmax.f32 %v1131, %v1087
          %v1134 = vmax.f32 %v1132, %v1088
          %v1135 = vmax.f32 %v1133, %v1089
          %v1136 = vmax.f32 %v1134, %v1090
          %v1137 = vmax.f32 %v1135, %v1091
          %v1138 = vmax.f32 %v1136, %v1092
          %v1139 = vmax.f32 %v1137, %v1093
          %v1140 = vmax.f32 %v1138, %v1094
          %v1141 = vmax.f32 %v1139, %v1140
          %v1142 = vrot.slane %v1141, 4
          %v1143 = vmax.f32 %v1141, %v1142
          %v1144 = vrot.slane %v1143, 2
          %v1145 = vmax.f32 %v1143, %v1144
          %v1146 = vrot.slane %v1145, 1
          %v1147 = vmax.f32 %v1145, %v1146
          %v1148 = vmax.f32 %v1111, %v1113
          %v1149 = vmax.f32 %v1112, %v1114
          %v1150 = vmax.f32 %v1148, %v1115
          %v1151 = vmax.f32 %v1149, %v1116
          %v1152 = vmax.f32 %v1150, %v1117
          %v1153 = vmax.f32 %v1151, %v1118
          %v1154 = vmax.f32 %v1152, %v1119
          %v1155 = vmax.f32 %v1153, %v1120
          %v1156 = vmax.f32 %v1154, %v1121
          %v1157 = vmax.f32 %v1155, %v1122
          %v1158 = vmax.f32 %v1156, %v1123
          %v1159 = vmax.f32 %v1157, %v1124
          %v1160 = vmax.f32 %v1158, %v1125
          %v1161 = vmax.f32 %v1159, %v1126
          %v1162 = vmax.f32 %v1160, %v1161
          %v1163 = vrot.slane %v1162, 4
          %v1164 = vmax.f32 %v1162, %v1163
          %v1165 = vrot.slane %v1164, 2
          %v1166 = vmax.f32 %v1164, %v1165
          %v1167 = vrot.slane %v1166, 1
          %v1168 = vmax.f32 %v1166, %v1167
          %v1169 = vmul.f32 %v1009, 0.00390625
          %v1170 = vmul.f32 %v1030, 0.00390625
          %v1171 = vmul.f32 %v1147, 0.2
          %v1172 = vmul.f32 %v1168, 0.2
          %v1173 = vadd.f32 %v1169, %v1171
          %v1174 = vadd.f32 %v1170, %v1172
          %v1177 = vrot.slane %v1174, 7
          %vm1178 = vcmask 1040384
          %v1179 = vsel %vm1178, %v1173, %v1177
          %v1181 = vlaneseq
          %vm1182 = vcmp.ge.s32.totalorder %v1181, 0
          %vm1183 = vcmp.lt.s32.totalorder %v1181, 256
          %vm1184 = vmand %vm1182, %vm1183
          %1185 = vst.msk [vmem:[%s184] sm:$0x3] %vm1184, %v1179
        $region36: #{tpu_custom_call.1} parent=27 // pred_fallthru
          _
        %s1186 = sand.u32 %s99, 1
        %s1187 = scalar_lea.sflag [#allocation5], %s1186
        %s1188 = sand.u32 %s99, 1
        %s1189 = smul.addr %s1188, 2
        %s1190 = scalar_lea.vmem [#allocation4], %s1189
        // Predicated region
        $region37: #{tpu_custom_call.1} parent=27 // pred_check
          %p1191 = pneg %p109
        $region38: #{tpu_custom_call.1} parent=27 // pred_check_branch
          %1193 = sbr.rel (%p1191) target = $region40
        $region39: #{tpu_custom_call.1} parent=27 // pred_region
          %s1194 = smul.u32 2, %s22
          %1196 = vsyncadd %s1187, 0
          %s1197 = smul.addr %s21, 2
          %s1198 = sadd.s32 %s1194, %s1197
          %s1199 = scalar_lea.hbm %s2, %s1198
          %s1201 = sshll.u32 %s1190, 4
          %s1202 = int_to_ptr.vmem [resolvable:$true] %s1201
          %s1203 = sshll.u32 %s1199, 4
          %s1204 = int_to_ptr.hbm [resolvable:$true] %s1203
          %1206 = dma.vmem_to_hbm [thread:$0]  %s1202, 32, %s1204, %s1187
        $region40: #{tpu_custom_call.1} parent=27 // pred_fallthru
          _
      $region28: #{tpu_custom_call.1} parent=5 // pred_fallthru
        _
      %p1207 = scmp.le.s32.totalorder 2, %s11
      // Predicated region
      $region41: #{tpu_custom_call.1} parent=5 // pred_check
        %p1208 = pneg %p1207
      $region42: #{tpu_custom_call.1} parent=5 // pred_check_branch
        %1210 = sbr.rel (%p1208) target = $region44
      $region43: #{tpu_custom_call.1} parent=5 // pred_region
        %s1211 = ssub.s32 %s11, 2
        // Predicated region
        $region45: #{tpu_custom_call.1} parent=43 // pred_check
          %p1212 = pneg %p115
        $region46: #{tpu_custom_call.1} parent=43 // pred_check_branch
          %1214 = sbr.rel (%p1212) target = $region48
        $region47: #{tpu_custom_call.1} parent=43 // pred_region
          %s1215 = sand.u32 %s100, 1
          %s1216 = scalar_lea.sflag [#allocation5], %s1215
          %s1217 = sand.u32 %s100, 1
          %s1218 = smul.addr %s1217, 2
          %s1219 = scalar_lea.vmem [#allocation4], %s1218
          %1221 = dma.done %s1216, 32
        $region48: #{tpu_custom_call.1} parent=43 // pred_fallthru
          _
      $region44: #{tpu_custom_call.1} parent=5 // pred_fallthru
        _
    $region6: #{tpu_custom_call.1} parent=1 // loop_footer
      %s15 = sadd.s32 1, %s11
    $region7: #{tpu_custom_call.1} parent=1 // loop_footer_branch
      %10 = sbr.rel target = $region3
    $region8: #{tpu_custom_call.1} parent=1 // loop_exit
      _
    %1222 = vsyncpa [#allocation5], 1
    %s1223 = scalar_lea.sflag [#allocation5], 1
    %1224 = vsyncpa %s1223, 1

</llo_original>
